<compile_context>
chip_gen: v7x
topology: tpu7x:2x2x1
jax: 0.10.0
libtpu: 0.0.40
codegen_flags: <defaults>
</compile_context>

<pallas_src>
import jax
import jax.numpy as jnp
from jax.experimental import pallas as pl
from jax.experimental.pallas import tpu as pltpu


def _pa_kernel(x_ref, w_ref, b_ref, o_ref):
    """One (1, C, TS) tile: 1x1 conv (rank-1 VPU updates) -> sigmoid -> x * gate.

    x_ref : VMEM (1, C, TS)  input tile (spatial in lanes, channels in sublanes)
    w_ref : VMEM (C, C, 1)   conv weight columns; w_ref[i] == weight[:, i] as (C, 1)
    b_ref : VMEM (C, 1)      conv bias
    o_ref : VMEM (1, C, TS)  output tile
    """
    x = x_ref[0].astype(jnp.float32)            # (C, TS)
    C = x.shape[0]

    # y = W @ x + b, accumulated as C rank-1 updates at full (C, TS) width.
    #   weight column (C, 1) broadcasts along lanes, x row (1, TS) broadcasts
    #   along sublanes -> every mul/add covers the whole channel block.
    acc = w_ref[0] * x[0:1, :] + b_ref[...]     # (C, TS), f32
    for i in range(1, C):                       # unrolled: C is small & static
        acc = acc + w_ref[i] * x[i:i + 1, :]

    gate = jax.nn.sigmoid(acc)                  # EUP (transcendental slot)
    o_ref[0] = (x * gate).astype(o_ref.dtype)   # pixel-attention modulation


def pa_forward(x_nchw, weight, bias, *, target_block_bytes=512 * 1024):
    """Pixel-attention forward, NCHW in / NCHW out (matches PyTorch).

    x_nchw : (N, C, H, W)
    weight : (C_out, C_in) or (C_out, C_in, 1, 1)  -- PyTorch Conv2d(C, C, 1).weight
    bias   : (C_out,)
    """
    N, C, H, W = x_nchw.shape
    S = H * W
    x3 = x_nchw.reshape(N, C, S)                # free reshape, no transpose

    if weight.ndim == 4:                        # accept raw Conv2d weight layout
        weight = weight.reshape(weight.shape[0], weight.shape[1])

    # Lane-dense spatial tile sized to ~target_block_bytes per grid step.
    itemsize = jnp.dtype(x_nchw.dtype).itemsize
    ts = max(128, (target_block_bytes // (C * itemsize)) // 128 * 128)
    if S <= ts:
        ts, grid_s = S, 1                       # whole spatial extent per step
    else:
        grid_s = pl.cdiv(S, ts)                 # ragged tail masked by Pallas

    # Weight columns as (C_in, C_out, 1) so w_cols[i] == weight[:, i] as (C, 1);
    # bias as (C, 1).  Tiny arrays, resident in VMEM for the whole grid.
    w_cols = weight.astype(jnp.float32).T.reshape(C, C, 1)
    b_col = bias.astype(jnp.float32).reshape(C, 1)

    out3 = pl.pallas_call(
        _pa_kernel,
        out_shape=jax.ShapeDtypeStruct((N, C, S), x_nchw.dtype),
        grid_spec=pltpu.PrefetchScalarGridSpec(
            num_scalar_prefetch=0,
            grid=(N, grid_s),
            in_specs=[
                pl.BlockSpec((1, C, ts), lambda n, s: (n, 0, s)),   # x tile
                pl.BlockSpec((C, C, 1), lambda n, s: (0, 0, 0)),    # weight cols
                pl.BlockSpec((C, 1), lambda n, s: (0, 0)),          # bias
            ],
            out_specs=pl.BlockSpec((1, C, ts), lambda n, s: (n, 0, s)),
        ),
        compiler_params=pltpu.CompilerParams(
            dimension_semantics=("parallel", "parallel")),
    )(x3, w_cols, b_col)

    return out3.reshape(N, C, H, W)


def _pa_reference(x_nchw, weight, bias):
    # Pure-JAX reference of the PyTorch module for a correctness check.
    y = jnp.einsum("nchw,oc->nohw", x_nchw, weight) + bias[None, :, None, None]
    return x_nchw * jax.nn.sigmoid(y)


if __name__ == "__main__":
    key = jax.random.PRNGKey(0)
    kx, kw, kb = jax.random.split(key, 3)

    N, C, H, W = 2, 4, 16, 16                   # nf = 4
    x = jax.random.normal(kx, (N, C, H, W), dtype=jnp.float32)
    # Deterministic synthetic conv parameters (Conv2d(nf, nf, 1) -> (C, C, 1, 1))
    weight = jax.random.normal(kw, (C, C), dtype=jnp.float32) * 0.1
    bias = jax.random.normal(kb, (C,), dtype=jnp.float32) * 0.1

    pa = jax.jit(pa_forward)
    out = jax.block_until_ready(pa(x, weight, bias))

    ref = _pa_reference(x, weight, bias)
    assert out.shape == (N, C, H, W)
    assert jnp.allclose(out, ref, atol=1e-5, rtol=1e-5), "mismatch vs reference"

    print("KERNEL_OK")
</pallas_src>

<mosaic_0001>
module attributes {stable_mosaic.version = 11 : i64} {
  func.func @_pa_kernel(%arg0: i32, %arg1: i32, %arg2: memref<1x4x256xf32, #tpu.memory_space<vmem>>, %arg3: memref<4x4x1xf32, #tpu.memory_space<vmem>>, %arg4: memref<4x1xf32, #tpu.memory_space<vmem>>, %arg5: memref<1x4x256xf32, #tpu.memory_space<vmem>>) attributes {dimension_semantics = [#tpu.dimension_semantics<parallel>, #tpu.dimension_semantics<parallel>], iteration_bounds = array<i64: 2, 1>, scalar_prefetch = 0 : i64, scratch_operands = 0 : i64, tpu.core_type = #tpu.core_type<tc>, window_params = [{transform_indices = @transform_0, window_bounds = array<i64: 1, 4, 256>}, {pipeline_mode = #tpu.pipeline_mode<synchronous>, transform_indices = @transform_1, window_bounds = array<i64: 4, 4, 1>}, {pipeline_mode = #tpu.pipeline_mode<synchronous>, transform_indices = @transform_2, window_bounds = array<i64: 4, 1>}, {transform_indices = @transform_3, window_bounds = array<i64: 1, 4, 256>}]} {
    %c0 = arith.constant 0 : index
    %c0_0 = arith.constant 0 : index
    %c0_1 = arith.constant 0 : index
    %0 = vector.load %arg2[%c0, %c0_0, %c0_1] : memref<1x4x256xf32, #tpu.memory_space<vmem>>, vector<1x4x256xf32>
    %1 = vector.shape_cast %0 : vector<1x4x256xf32> to vector<4x256xf32>
    %c0_2 = arith.constant 0 : index
    %c0_3 = arith.constant 0 : index
    %c0_4 = arith.constant 0 : index
    %2 = vector.load %arg3[%c0_2, %c0_3, %c0_4] : memref<4x4x1xf32, #tpu.memory_space<vmem>>, vector<1x4x1xf32>
    %3 = vector.shape_cast %2 : vector<1x4x1xf32> to vector<4x1xf32>
    %4 = vector.extract_strided_slice %1 {offsets = [0, 0], sizes = [1, 256], strides = [1, 1]} : vector<4x256xf32> to vector<1x256xf32>
    %5 = vector.broadcast %3 : vector<4x1xf32> to vector<4x256xf32>
    %6 = vector.broadcast %4 : vector<1x256xf32> to vector<4x256xf32>
    %7 = arith.mulf %5, %6 : vector<4x256xf32>
    %c0_5 = arith.constant 0 : index
    %c0_6 = arith.constant 0 : index
    %8 = vector.load %arg4[%c0_5, %c0_6] : memref<4x1xf32, #tpu.memory_space<vmem>>, vector<4x1xf32>
    %9 = vector.broadcast %8 : vector<4x1xf32> to vector<4x256xf32>
    %10 = arith.addf %7, %9 : vector<4x256xf32>
    %c1 = arith.constant 1 : index
    %c0_7 = arith.constant 0 : index
    %c0_8 = arith.constant 0 : index
    %11 = vector.load %arg3[%c1, %c0_7, %c0_8] : memref<4x4x1xf32, #tpu.memory_space<vmem>>, vector<1x4x1xf32>
    %12 = vector.shape_cast %11 : vector<1x4x1xf32> to vector<4x1xf32>
    %13 = vector.extract_strided_slice %1 {offsets = [1, 0], sizes = [1, 256], strides = [1, 1]} : vector<4x256xf32> to vector<1x256xf32>
    %14 = vector.broadcast %12 : vector<4x1xf32> to vector<4x256xf32>
    %15 = vector.broadcast %13 : vector<1x256xf32> to vector<4x256xf32>
    %16 = arith.mulf %14, %15 : vector<4x256xf32>
    %17 = arith.addf %10, %16 : vector<4x256xf32>
    %c2 = arith.constant 2 : index
    %c0_9 = arith.constant 0 : index
    %c0_10 = arith.constant 0 : index
    %18 = vector.load %arg3[%c2, %c0_9, %c0_10] : memref<4x4x1xf32, #tpu.memory_space<vmem>>, vector<1x4x1xf32>
    %19 = vector.shape_cast %18 : vector<1x4x1xf32> to vector<4x1xf32>
    %20 = vector.extract_strided_slice %1 {offsets = [2, 0], sizes = [1, 256], strides = [1, 1]} : vector<4x256xf32> to vector<1x256xf32>
    %21 = vector.broadcast %19 : vector<4x1xf32> to vector<4x256xf32>
    %22 = vector.broadcast %20 : vector<1x256xf32> to vector<4x256xf32>
    %23 = arith.mulf %21, %22 : vector<4x256xf32>
    %24 = arith.addf %17, %23 : vector<4x256xf32>
    %c3 = arith.constant 3 : index
    %c0_11 = arith.constant 0 : index
    %c0_12 = arith.constant 0 : index
    %25 = vector.load %arg3[%c3, %c0_11, %c0_12] : memref<4x4x1xf32, #tpu.memory_space<vmem>>, vector<1x4x1xf32>
    %26 = vector.shape_cast %25 : vector<1x4x1xf32> to vector<4x1xf32>
    %27 = vector.extract_strided_slice %1 {offsets = [3, 0], sizes = [1, 256], strides = [1, 1]} : vector<4x256xf32> to vector<1x256xf32>
    %28 = vector.broadcast %26 : vector<4x1xf32> to vector<4x256xf32>
    %29 = vector.broadcast %27 : vector<1x256xf32> to vector<4x256xf32>
    %30 = arith.mulf %28, %29 : vector<4x256xf32>
    %31 = arith.addf %24, %30 : vector<4x256xf32>
    %32 = arith.negf %31 : vector<4x256xf32>
    %33 = math.exp %32 : vector<4x256xf32>
    %cst = arith.constant 1.000000e+00 : f32
    %34 = vector.broadcast %cst : f32 to vector<4x256xf32>
    %35 = arith.addf %34, %33 : vector<4x256xf32>
    %36 = arith.divf %34, %35 : vector<4x256xf32>
    %37 = arith.mulf %1, %36 : vector<4x256xf32>
    %c0_13 = arith.constant 0 : index
    %c0_14 = arith.constant 0 : index
    %c0_15 = arith.constant 0 : index
    %38 = vector.load %arg5[%c0_13, %c0_14, %c0_15] : memref<1x4x256xf32, #tpu.memory_space<vmem>>, vector<1x4x256xf32>
    %39 = vector.shape_cast %38 : vector<1x4x256xf32> to vector<4x256xf32>
    %40 = vector.shape_cast %37 : vector<4x256xf32> to vector<1x4x256xf32>
    tpu.vector_store %arg5[%c0_13, %c0_14, %c0_15], %40 {strides = array<i32>} : memref<1x4x256xf32, #tpu.memory_space<vmem>>, vector<1x4x256xf32>,
    return
  }
  func.func @transform_0(%arg0: i32, %arg1: i32) -> (i32, i32, i32) {
    %c0_i32 = arith.constant 0 : i32
    %c0_i32_0 = arith.constant 0 : i32
    return %arg0, %c0_i32, %arg1 : i32, i32, i32
  }
  func.func @transform_1(%arg0: i32, %arg1: i32) -> (i32, i32, i32) {
    %c0_i32 = arith.constant 0 : i32
    %c0_i32_0 = arith.constant 0 : i32
    %c0_i32_1 = arith.constant 0 : i32
    %c0_i32_2 = arith.constant 0 : i32
    return %c0_i32, %c0_i32_0, %c0_i32_1 : i32, i32, i32
  }
  func.func @transform_2(%arg0: i32, %arg1: i32) -> (i32, i32) {
    %c0_i32 = arith.constant 0 : i32
    %c0_i32_0 = arith.constant 0 : i32
    %c0_i32_1 = arith.constant 0 : i32
    return %c0_i32, %c0_i32_0 : i32, i32
  }
  func.func @transform_3(%arg0: i32, %arg1: i32) -> (i32, i32, i32) {
    %c0_i32 = arith.constant 0 : i32
    %c0_i32_0 = arith.constant 0 : i32
    return %arg0, %c0_i32, %arg1 : i32, i32, i32
  }
}

</mosaic_0001>

<llo_original>
// kernel: pa_forward.1
$region0: #{pa_forward.1}
  #allocation0 [shape = 'u32[]', space=smem, size = 0x4, offset = 0x4, fixed_abs, tag = 'smem constant byte address 0x4 - core index']
  #allocation1 [shape = 'u32[144,128]{1,0:T(1,128)}', space=vmem, size = 0x12000, scoped, tag = 'internal scratch']
  %s0 = inlined_call_operand.vmem [shape: f32[2,4,256], index: 0, kind: input, shape index: {}]
  %s1 = inlined_call_operand.vmem [shape: f32[4,4,1], index: 1, kind: input, shape index: {}]
  %s2 = inlined_call_operand.vmem [shape: f32[4,1], index: 2, kind: input, shape index: {}]
  %s3 = inlined_call_operand.vmem [shape: f32[2,4,256], index: 3, kind: output, shape index: {}]
  %s4 = sld [smem:[#allocation0]]
  $region45: #{pa_forward.1} parent=0
    _
  %s6 = ssub.s32 1, %s4
  %s7 = scalar_select 0, %s6, %s4
  loop: start=0, step=1, limit=4
  $region2: #{pa_forward.1} parent=0 // loop_pre_header
    _
  $region3: #{pa_forward.1} parent=0 // loop_header
    %s9 = sphi 0, %s13
    %p10 = scmp.ge.s32.totalorder %s9, 4
    %s16 = sphi 0, %s28
    %s17 = sphi 0, %s24
    %s18 = sphi 0, %s16
    %s19 = sphi 0, %s17
    %s20 = sphi 0, %s18
    %s21 = sphi 0, %s19
    %s33 = sphi 0, %s35
    %s36 = sphi 0, %s33
    %s37 = sphi 0, %s36
    %s53 = sphi 0, %s37
    %s57 = sphi 0, %s57
    %s59 = sphi 0, %s57
    %s60 = sphi 0, %s59
    %s74 = sphi 0, %s60
    %s78 = sphi 0, %s78
    %s80 = sphi 0, %s78
    %s81 = sphi 0, %s80
    %s95 = sphi 0, %s81
    %s103 = sphi 0, %s105
    %s106 = sphi 0, %s103
    %s107 = sphi 0, %s106
    %s123 = sphi 0, %s107
  $region4: #{pa_forward.1} parent=0 // loop_header_branch
    %12 = sbr.rel (%p10) target = $region8
  $region5: #{pa_forward.1} parent=0 // loop_body
    %s14 = ssub.s32 %s9, 1
    %s15 = ssub.s32 %s9, 2
    %s22 = sadd.s32 1, %s17
    %p23 = scmp.ge.s32.totalorder %s22, 1
    %s24 = scalar_select %p23, 0, %s22
    %s25 = sadd.s32 1, %s16
    %s26 = scalar_select %p23, %s25, %s16
    %p27 = scmp.ge.s32.totalorder %s26, 2
    %s28 = scalar_select %p27, 0, %s26
    %s29 = ssub.s32 %s16, %s28
    %s30 = ssub.s32 %s17, %s24
    %s31 = sor.u32 %s29, %s30
    %p32 = scmp.eq.s32.totalorder %s31, 0
    %s34 = sadd.s32 %s33, 1
    %s35 = scalar_select %p32, %s33, %s34
    %p38 = pneg %p32
    %p39 = scmp.eq.s32.totalorder %s9, 1
    %p40 = por %p38, %p39
    %p41 = scmp.ne.s32.totalorder %s33, %s36
    %p42 = scmp.eq.s32.totalorder %s9, 0
    %p43 = por %p41, %p42
    %p44 = scmp.ne.s32.totalorder %s33, %s36
    %p45 = scmp.eq.s32.totalorder %s14, 1
    %p46 = por %p44, %p45
    %p47 = scmp.ne.s32.totalorder %s36, %s37
    %p48 = scmp.eq.s32.totalorder %s14, 0
    %p49 = por %p47, %p48
    %p50 = scmp.ne.s32.totalorder %s36, %s37
    %p51 = scmp.eq.s32.totalorder %s15, 1
    %p52 = por %p50, %p51
    %p54 = scmp.ne.s32.totalorder %s37, %s53
    %p55 = scmp.eq.s32.totalorder %s15, 0
    %p56 = por %p54, %p55
    %s58 = sadd.s32 %s57, 1
    %p61 = scmp.eq.s32.totalorder %s9, 1
    %p62 = scmp.ne.s32.totalorder %s57, %s59
    %p63 = scmp.eq.s32.totalorder %s9, 0
    %p64 = por %p62, %p63
    %p65 = scmp.ne.s32.totalorder %s57, %s59
    %p66 = scmp.eq.s32.totalorder %s14, 1
    %p67 = por %p65, %p66
    %p68 = scmp.ne.s32.totalorder %s59, %s60
    %p69 = scmp.eq.s32.totalorder %s14, 0
    %p70 = por %p68, %p69
    %p71 = scmp.ne.s32.totalorder %s59, %s60
    %p72 = scmp.eq.s32.totalorder %s15, 1
    %p73 = por %p71, %p72
    %p75 = scmp.ne.s32.totalorder %s60, %s74
    %p76 = scmp.eq.s32.totalorder %s15, 0
    %p77 = por %p75, %p76
    %s79 = sadd.s32 %s78, 1
    %p82 = scmp.eq.s32.totalorder %s9, 1
    %p83 = scmp.ne.s32.totalorder %s78, %s80
    %p84 = scmp.eq.s32.totalorder %s9, 0
    %p85 = por %p83, %p84
    %p86 = scmp.ne.s32.totalorder %s78, %s80
    %p87 = scmp.eq.s32.totalorder %s14, 1
    %p88 = por %p86, %p87
    %p89 = scmp.ne.s32.totalorder %s80, %s81
    %p90 = scmp.eq.s32.totalorder %s14, 0
    %p91 = por %p89, %p90
    %p92 = scmp.ne.s32.totalorder %s80, %s81
    %p93 = scmp.eq.s32.totalorder %s15, 1
    %p94 = por %p92, %p93
    %p96 = scmp.ne.s32.totalorder %s81, %s95
    %p97 = scmp.eq.s32.totalorder %s15, 0
    %p98 = por %p96, %p97
    %s99 = ssub.s32 %s16, %s28
    %s100 = ssub.s32 %s17, %s24
    %s101 = sor.u32 %s99, %s100
    %p102 = scmp.eq.s32.totalorder %s101, 0
    %s104 = sadd.s32 %s103, 1
    %s105 = scalar_select %p102, %s103, %s104
    %p108 = pneg %p102
    %p109 = scmp.eq.s32.totalorder %s9, 1
    %p110 = por %p108, %p109
    %p111 = scmp.ne.s32.totalorder %s103, %s106
    %p112 = scmp.eq.s32.totalorder %s9, 0
    %p113 = por %p111, %p112
    %p114 = scmp.ne.s32.totalorder %s103, %s106
    %p115 = scmp.eq.s32.totalorder %s14, 1
    %p116 = por %p114, %p115
    %p117 = scmp.ne.s32.totalorder %s106, %s107
    %p118 = scmp.eq.s32.totalorder %s14, 0
    %p119 = por %p117, %p118
    %p120 = scmp.ne.s32.totalorder %s106, %s107
    %p121 = scmp.eq.s32.totalorder %s15, 1
    %p122 = por %p120, %p121
    %p124 = scmp.ne.s32.totalorder %s107, %s123
    %p125 = scmp.eq.s32.totalorder %s15, 0
    %p126 = por %p124, %p125
    %p127 = scmp.le.s32.totalorder 1, %s9
    %p128 = scmp.lt.s32.totalorder %s9, 3
    %p129 = pnand %p127, %p128
    %p130 = pneg %p129
    // Predicated region
    $region9: #{pa_forward.1} parent=5 // pred_check
      _
    $region10: #{pa_forward.1} parent=5 // pred_check_branch
      %132 = sbr.rel (%p129) target = $region12
    $region11: #{pa_forward.1} parent=5 // pred_region
      %s133 = ssub.s32 %s9, 1
      // Predicated region
      $region13: #{pa_forward.1} parent=11 // pred_check
        %p134 = pneg %p70
      $region14: #{pa_forward.1} parent=11 // pred_check_branch
        %136 = sbr.rel (%p134) target = $region16
      $region15: #{pa_forward.1} parent=11 // pred_region
        _
      $region16: #{pa_forward.1} parent=11 // pred_fallthru
        _
      // Predicated region
      $region17: #{pa_forward.1} parent=11 // pred_check
        %p137 = pneg %p91
      $region18: #{pa_forward.1} parent=11 // pred_check_branch
        %139 = sbr.rel (%p137) target = $region20
      $region19: #{pa_forward.1} parent=11 // pred_region
        _
      $region20: #{pa_forward.1} parent=11 // pred_fallthru
        _
    $region12: #{pa_forward.1} parent=5 // pred_fallthru
      _
    %p140 = scmp.lt.s32.totalorder %s9, 2
    // Predicated region
    $region21: #{pa_forward.1} parent=5 // pred_check
      %p141 = pneg %p140
    $region22: #{pa_forward.1} parent=5 // pred_check_branch
      %143 = sbr.rel (%p141) target = $region24
    $region23: #{pa_forward.1} parent=5 // pred_region
      // Predicated region
      $region25: #{pa_forward.1} parent=23 // pred_check
        %p144 = pneg %p43
      $region26: #{pa_forward.1} parent=23 // pred_check_branch
        %146 = sbr.rel (%p144) target = $region28
      $region27: #{pa_forward.1} parent=23 // pred_region
        %s147 = smul.u32 2, %s17
        %p148 = scmp.lt.s32.totalorder %s16, 1
        %s149 = scalar_select %p148, %s16, 1
        %p150 = scmp.lt.s32.totalorder %s147, 1
        %s151 = scalar_select %p150, %s147, 1
        %s152 = smul.addr %s149, 2
        %s153 = sadd.s32 %s151, %s152
        %s154 = smul.addr %s153, 4
        %s155 = scalar_lea.vmem %s0, %s154
        %s156 = smul.u32 2, %s17
      $region28: #{pa_forward.1} parent=23 // pred_fallthru
        _
    $region24: #{pa_forward.1} parent=5 // pred_fallthru
      _
    %p157 = scmp.le.s32.totalorder 1, %s9
    %p158 = scmp.lt.s32.totalorder %s9, 3
    %p159 = pnand %p157, %p158
    %p160 = pneg %p159
    // Predicated region
    $region29: #{pa_forward.1} parent=5 // pred_check
      _
    $region30: #{pa_forward.1} parent=5 // pred_check_branch
      %162 = sbr.rel (%p159) target = $region32
    $region31: #{pa_forward.1} parent=5 // pred_region
      %s163 = ssub.s32 %s9, 1
      %s164 = smul.u32 2, %s19
      %p165 = scmp.lt.s32.totalorder %s18, 1
      %s166 = scalar_select %p165, %s18, 1
      %p167 = scmp.lt.s32.totalorder %s164, 1
      %s168 = scalar_select %p167, %s164, 1
      %s169 = smul.addr %s166, 2
      %s170 = sadd.s32 %s168, %s169
      %s171 = smul.addr %s170, 4
      %s172 = scalar_lea.vmem %s0, %s171
      %p173 = pneg %p49
      %p174 = pneg %p46
      %p175 = pneg %p70
      %p176 = pneg %p67
      %p177 = pneg %p91
      %p178 = pneg %p88
      %p179 = pneg %p119
      %p180 = pneg %p116
      %s181 = smul.u32 2, %s19
      %p182 = scmp.lt.s32.totalorder %s18, 1
      %s183 = scalar_select %p182, %s18, 1
      %p184 = scmp.lt.s32.totalorder %s181, 1
      %s185 = scalar_select %p184, %s181, 1
      %s186 = smul.addr %s183, 2
      %s187 = sadd.s32 %s185, %s186
      %s188 = smul.addr %s187, 4
      %s189 = scalar_lea.vmem %s3, %s188
      %s190 = smul.u32 2, %s19
      %p191 = scmp.lt.s32.totalorder %s18, 1
      %s192 = scalar_select %p191, %s18, 1
      %p193 = scmp.lt.s32.totalorder %s190, 1
      %s194 = scalar_select %p193, %s190, 1
      %s195 = smul.addr %s192, 2
      %s196 = sadd.s32 %s194, %s195
      %s197 = smul.addr %s196, 4
      %s198 = scalar_lea.vmem %s0, %s197
      %s199 = smul.u32 2, %s19
      %s200 = smul.u32 2, %s19
      %p201 = scmp.lt.s32.totalorder %s18, 1
      %s202 = scalar_select %p201, %s18, 1
      %p203 = scmp.lt.s32.totalorder %s200, 1
      %s204 = scalar_select %p203, %s200, 1
      %s205 = smul.addr %s202, 2
      %s206 = sadd.s32 %s204, %s205
      %s207 = smul.addr %s206, 4
      %s208 = scalar_lea.vmem %s3, %s207
      %s209 = smul.u32 2, %s19
      %v210 = vld [vmem:[%s198] sm:$0xff]
      %v211 = vld [vmem:[%s1] sm:$0xf]
      %213 = vset.pattern.permute.xlu0 0
      %214 = vperm.xlu0 %213, %v211
      %v215 = vpop.permute.xlu0 %214
      %v218 = vlaneseq
      %v219 = vshrl.u32 %v218, 7
      %v220 = vsub.s32 0, %v219
      %v221 = vrot.slane %v210, %v220
      %v222 = vlaneseq
      %v223 = vshrl.u32 %v222, 7
      %v224 = vsub.s32 4, %v223
      %v225 = vrot.slane %v210, %v224
      %v228 = vlaneseq
      %v229 = vshrl.u32 %v228, 7
      %v230 = vsub.s32 0, %v229
      %v231 = vrot.slane %v221, %v230
      %v232 = vlaneseq
      %v233 = vshrl.u32 %v232, 7
      %v234 = vsub.s32 0, %v233
      %v235 = vrot.slane %v225, %v234
      %v236 = vmul.f32 %v215, %v231
      %v237 = vmul.f32 %v215, %v235
      %v238 = vld [vmem:[%s2] sm:$0xf]
      %240 = vset.pattern.permute.xlu0 0
      %241 = vperm.xlu0 %240, %v238
      %v242 = vpop.permute.xlu0 %241
      %v244 = vadd.f32 %v236, %v242
      %v245 = vadd.f32 %v237, %v242
      %s246 = scalar_lea.vmem %s1, 4
      %v247 = vld [vmem:[%s246] sm:$0xf]
      %249 = vset.pattern.permute.xlu0 0
      %250 = vperm.xlu0 %249, %v247
      %v251 = vpop.permute.xlu0 %250
      %v253 = vlaneseq
      %v254 = vshrl.u32 %v253, 7
      %v255 = vsub.s32 1, %v254
      %v256 = vrot.slane %v210, %v255
      %v257 = vlaneseq
      %v258 = vshrl.u32 %v257, 7
      %v259 = vsub.s32 5, %v258
      %v260 = vrot.slane %v210, %v259
      %v263 = vlaneseq
      %v264 = vshrl.u32 %v263, 7
      %v265 = vsub.s32 1, %v264
      %v266 = vrot.slane %v256, %v265
      %v267 = vlaneseq
      %v268 = vshrl.u32 %v267, 7
      %v269 = vsub.s32 1, %v268
      %v270 = vrot.slane %v260, %v269
      %v271 = vmul.f32 %v251, %v266
      %v272 = vmul.f32 %v251, %v270
      %v273 = vadd.f32 %v244, %v271
      %v274 = vadd.f32 %v245, %v272
      %s275 = scalar_lea.vmem %s1, 8
      %v276 = vld [vmem:[%s275] sm:$0xf]
      %278 = vset.pattern.permute.xlu0 0
      %279 = vperm.xlu0 %278, %v276
      %v280 = vpop.permute.xlu0 %279
      %v282 = vlaneseq
      %v283 = vshrl.u32 %v282, 7
      %v284 = vsub.s32 2, %v283
      %v285 = vrot.slane %v210, %v284
      %v286 = vlaneseq
      %v287 = vshrl.u32 %v286, 7
      %v288 = vsub.s32 6, %v287
      %v289 = vrot.slane %v210, %v288
      %v292 = vlaneseq
      %v293 = vshrl.u32 %v292, 7
      %v294 = vsub.s32 2, %v293
      %v295 = vrot.slane %v285, %v294
      %v296 = vlaneseq
      %v297 = vshrl.u32 %v296, 7
      %v298 = vsub.s32 2, %v297
      %v299 = vrot.slane %v289, %v298
      %v300 = vmul.f32 %v280, %v295
      %v301 = vmul.f32 %v280, %v299
      %v302 = vadd.f32 %v273, %v300
      %v303 = vadd.f32 %v274, %v301
      %s304 = scalar_lea.vmem %s1, 12
      %v305 = vld [vmem:[%s304] sm:$0xf]
      %307 = vset.pattern.permute.xlu0 0
      %308 = vperm.xlu0 %307, %v305
      %v309 = vpop.permute.xlu0 %308
      %v311 = vlaneseq
      %v312 = vshrl.u32 %v311, 7
      %v313 = vsub.s32 3, %v312
      %v314 = vrot.slane %v210, %v313
      %v315 = vlaneseq
      %v316 = vshrl.u32 %v315, 7
      %v317 = vsub.s32 7, %v316
      %v318 = vrot.slane %v210, %v317
      %v321 = vlaneseq
      %v322 = vshrl.u32 %v321, 7
      %v323 = vsub.s32 3, %v322
      %v324 = vrot.slane %v314, %v323
      %v325 = vlaneseq
      %v326 = vshrl.u32 %v325, 7
      %v327 = vsub.s32 3, %v326
      %v328 = vrot.slane %v318, %v327
      %v329 = vmul.f32 %v309, %v324
      %v330 = vmul.f32 %v309, %v328
      %v331 = vadd.f32 %v302, %v329
      %v332 = vadd.f32 %v303, %v330
      %v333 = vxor.u32 %v331, 2147483648
      %v334 = vxor.u32 %v332, 2147483648
      %v335 = vmul.f32 %v333, 1.442695
      %v336 = vpow.pop %v335
      %v337 = vmul.f32 %v334, 1.442695
      %v338 = vpow.pop %v337
      %v339 = vadd.f32 %v336, 1.0
      %v340 = vadd.f32 %v338, 1.0
      %v341 = vrcp.pop %v339
      %v342 = vmul.f32 1.0, %v341
      %v343 = vrcp.pop %v340
      %v344 = vmul.f32 1.0, %v343
      %v347 = vcombine.low %v342, %v344
      %v349 = vmul.f32 %v210, %v347
      %350 = vst [vmem:[%s208] sm:$0xff] %v349
      %s351 = smul.u32 2, %s19
      %p352 = scmp.lt.s32.totalorder %s18, 1
      %s353 = scalar_select %p352, %s18, 1
      %p354 = scmp.lt.s32.totalorder %s351, 1
      %s355 = scalar_select %p354, %s351, 1
      %s356 = smul.addr %s353, 2
      %s357 = sadd.s32 %s355, %s356
      %s358 = smul.addr %s357, 4
      %s359 = scalar_lea.vmem %s3, %s358
      // Predicated region
      $region33: #{pa_forward.1} parent=31 // pred_check
        %p360 = pneg %p116
      $region34: #{pa_forward.1} parent=31 // pred_check_branch
        %362 = sbr.rel (%p360) target = $region36
      $region35: #{pa_forward.1} parent=31 // pred_region
        %s363 = smul.u32 2, %s19
      $region36: #{pa_forward.1} parent=31 // pred_fallthru
        _
    $region32: #{pa_forward.1} parent=5 // pred_fallthru
      _
    %p364 = scmp.le.s32.totalorder 2, %s9
    // Predicated region
    $region37: #{pa_forward.1} parent=5 // pred_check
      %p365 = pneg %p364
    $region38: #{pa_forward.1} parent=5 // pred_check_branch
      %367 = sbr.rel (%p365) target = $region40
    $region39: #{pa_forward.1} parent=5 // pred_region
      %s368 = ssub.s32 %s9, 2
      // Predicated region
      $region41: #{pa_forward.1} parent=39 // pred_check
        %p369 = pneg %p122
      $region42: #{pa_forward.1} parent=39 // pred_check_branch
        %371 = sbr.rel (%p369) target = $region44
      $region43: #{pa_forward.1} parent=39 // pred_region
        %s372 = smul.u32 2, %s21
        %p373 = scmp.lt.s32.totalorder %s20, 1
        %s374 = scalar_select %p373, %s20, 1
        %p375 = scmp.lt.s32.totalorder %s372, 1
        %s376 = scalar_select %p375, %s372, 1
        %s377 = smul.addr %s374, 2
        %s378 = sadd.s32 %s376, %s377
        %s379 = smul.addr %s378, 4
        %s380 = scalar_lea.vmem %s3, %s379
      $region44: #{pa_forward.1} parent=39 // pred_fallthru
        _
    $region40: #{pa_forward.1} parent=5 // pred_fallthru
      _
  $region6: #{pa_forward.1} parent=0 // loop_footer
    %s13 = sadd.s32 1, %s9
  $region7: #{pa_forward.1} parent=0 // loop_footer_branch
    %8 = sbr.rel target = $region3
  $region8: #{pa_forward.1} parent=0 // loop_exit
    _

</llo_original>
